<compile_context>
chip_gen: v6e
topology: v6e:2x2x1
jax: 0.10.0
libtpu: 0.0.40
codegen_flags: <defaults>
</compile_context>

<pallas_src>
import functools

import jax
import jax.numpy as jnp
from jax import lax
from jax.experimental import pallas as pl
from jax.experimental.pallas import tpu as pltpu


def mixer_block_kernel(x_ref, gamma_ref, beta_ref, w1_ref, b1_ref, w2_ref, b2_ref,
                       o_ref, y_ref, *, eps):
    # x_ref / o_ref block: (Bt, P, H) bf16.   y_ref scratch: (P, Bt*H) bf16.
    bt, p, h = x_ref.shape
    inv_h = jnp.float32(1.0 / h)

    # Hoisted (1,H)->(P,H) broadcasts: JAX does not CSE broadcast_in_dim, so do
    # them once instead of once per batch element.
    gamma = jnp.broadcast_to(gamma_ref[...], (p, h)).astype(jnp.float32)
    beta = jnp.broadcast_to(beta_ref[...], (p, h)).astype(jnp.float32)

    # ---- LayerNorm over hidden_dim (f32 math), packed lane-folded into scratch.
    # Each iteration ends with a store to y_ref, so its live values die there;
    # the heavy intermediates below are outside the loop.
    for bb in range(bt):
        xb = x_ref[bb].astype(jnp.float32)                      # (P, H)
        mean = jnp.sum(xb, axis=-1, keepdims=True) * inv_h
        xc = xb - mean
        var = jnp.sum(xc * xc, axis=-1, keepdims=True) * inv_h  # two-pass (stable)
        yb = xc * lax.rsqrt(var + eps) * gamma + beta
        y_ref[:, bb * h:(bb + 1) * h] = yb.astype(jnp.bfloat16)

    # ---- Token-mixing MLP over the patch axis: batch folded into the N (lane)
    # dimension -> one wide dot per layer per block.  bf16 MXU inputs, f32 acc.
    hidden = jnp.dot(w1_ref[...], y_ref[...],
                     preferred_element_type=jnp.float32) + b1_ref[...]   # (D, Bt*H)
    hidden = jnp.maximum(hidden, 0.0)
    # TODO(synk): dropout layers are identity here (eval mode); no RNG masking.
    z = jnp.dot(w2_ref[...], hidden.astype(jnp.bfloat16),
                preferred_element_type=jnp.float32) + b2_ref[...]        # (P, Bt*H)

    # ---- Residual add + store (f32 add, bf16 store; lane-dense since H%128==0).
    for bb in range(bt):
        out_b = x_ref[bb].astype(jnp.float32) + z[:, bb * h:(bb + 1) * h]
        o_ref[bb] = out_b.astype(o_ref.dtype)


def _vmem_plan():
    """Per-generation (block-budget, vmem_limit) in bytes."""
    try:
        phys = int(pltpu.get_tpu_info().vmem_capacity_bytes)
    except Exception:
        phys = 64 * 1024 * 1024                      # conservative (v7x-sized) fallback
    if phys >= 100 * 1024 * 1024:                    # v5e / v6e: 128 MiB physical
        return 80 * 1024 * 1024, 100 * 1024 * 1024
    return 28 * 1024 * 1024, 56 * 1024 * 1024        # v7x: 64 MiB physical, keep headroom


def _choose_block_batch(B, P, H, D, vmem_budget_bytes):
    """Pick Bt (batch elements per grid step): VMEM-budgeted, divides B, and
    prefers an even grid extent >= 2 (v7x megacore), then the largest block."""
    # Conservative bytes per batch element:
    #   in+out blocks (bf16, double-buffered) 8*P*H, lane-folded scratch 2*P*H,
    #   z f32 4*P*H, LN temporaries ~12*P*H, hidden f32+bf16 6*D*H.
    per_b = 26 * P * H + 6 * D * H
    fixed = 8 * D * P + 64 * (D + P + H)             # resident bf16 weights + params
    cap = max(1, (vmem_budget_bytes - fixed) // per_b)
    cands = [c for c in range(1, B + 1) if B % c == 0 and c <= cap] or [1]

    def score(c):
        ext = B // c
        return (ext % 2 == 0, ext >= 2, c)           # even extent, >=2 steps, biggest

    return max(cands, key=score)


def mixer_block(x, gamma, beta, w1, b1, w2, b2, block_batch=None, eps=1e-5):
    """x: (B, P, H).  Weights follow PyTorch nn.Linear conventions:
       w1: (D, P), b1: (D,), w2: (P, D), b2: (P,).  Returns bf16 (B, P, H)."""
    B, P, H = x.shape
    D = w1.shape[0]
    budget, vmem_limit = _vmem_plan()
    Bt = block_batch if block_batch is not None else _choose_block_batch(B, P, H, D, budget)
    assert B % Bt == 0

    # Stream activations in bf16 (no-op if the caller already keeps them in bf16).
    xb = x.astype(jnp.bfloat16)
    gamma2 = gamma.reshape(1, H).astype(jnp.float32)
    beta2 = beta.reshape(1, H).astype(jnp.float32)
    w1b = w1.astype(jnp.bfloat16)                    # MXU peaks with bf16 inputs
    w2b = w2.astype(jnp.bfloat16)
    b1c = b1.reshape(D, 1).astype(jnp.float32)
    b2c = b2.reshape(P, 1).astype(jnp.float32)

    kernel = functools.partial(mixer_block_kernel, eps=eps)

    grid_spec = pltpu.PrefetchScalarGridSpec(
        num_scalar_prefetch=0,
        grid=(B // Bt,),
        in_specs=[
            pl.BlockSpec((Bt, P, H), lambda i: (i, 0, 0)),   # x (streamed, bf16)
            pl.BlockSpec((1, H),     lambda i: (0, 0)),      # gamma
            pl.BlockSpec((1, H),     lambda i: (0, 0)),      # beta
            pl.BlockSpec((D, P),     lambda i: (0, 0)),      # w1 (bf16, resident)
            pl.BlockSpec((D, 1),     lambda i: (0, 0)),      # b1
            pl.BlockSpec((P, D),     lambda i: (0, 0)),      # w2 (bf16, resident)
            pl.BlockSpec((P, 1),     lambda i: (0, 0)),      # b2
        ],
        out_specs=pl.BlockSpec((Bt, P, H), lambda i: (i, 0, 0)),
        scratch_shapes=[pltpu.VMEM((P, Bt * H), jnp.bfloat16)],   # lane-folded LN output
    )

    return pl.pallas_call(
        kernel,
        out_shape=jax.ShapeDtypeStruct((B, P, H), jnp.bfloat16),
        grid_spec=grid_spec,
        compiler_params=pltpu.CompilerParams(
            dimension_semantics=("parallel",),
            vmem_limit_bytes=vmem_limit),
    )(xb, gamma2, beta2, w1b, b1c, w2b, b2c)


def mixer_block_reference(x, gamma, beta, w1, b1, w2, b2, eps=1e-5):
    """Pure-JAX f32 reference mirroring the PyTorch forward (eval mode)."""
    mean = jnp.mean(x, axis=-1, keepdims=True)
    var = jnp.mean((x - mean) ** 2, axis=-1, keepdims=True)
    y = (x - mean) / jnp.sqrt(var + eps) * gamma + beta       # (B, P, H)
    yt = jnp.swapaxes(y, 1, 2)                                # (B, H, P)
    h = jnp.maximum(yt @ w1.T + b1, 0.0)                      # (B, H, D)
    z = h @ w2.T + b2                                         # (B, H, P)
    return x + jnp.swapaxes(z, 1, 2)


if __name__ == "__main__":
    # Small but lane-friendly shapes: hidden_dim a multiple of 128 so stores are
    # lane-dense.  B=8 -> Bt=4, grid extent 2 (even, one step per v7x core).
    B = 8            # batch
    P = 16           # num_patches
    H = 128          # hidden_dim
    D = 64           # token_mixer_dim

    key = jax.random.PRNGKey(0)
    kx, k1, k2, k3, k4 = jax.random.split(key, 5)

    # Activations live in bf16 (realistic mixer setup; the kernel streams them
    # as-is with no extra wrapper cast pass).
    x = jax.random.normal(kx, (B, P, H), dtype=jnp.float32).astype(jnp.bfloat16)

    # LayerNorm params (PyTorch init gamma=1, beta=0, perturbed for a non-trivial test).
    gamma = jnp.ones((H,), jnp.float32) + 0.01 * jnp.arange(H, dtype=jnp.float32)
    beta = 0.01 * jnp.arange(H, dtype=jnp.float32)

    # Token-mixer MLP params (nn.Linear(P -> D), nn.Linear(D -> P)).
    w1 = jax.random.normal(k1, (D, P), dtype=jnp.float32) * 0.1
    b1 = jax.random.normal(k2, (D,), dtype=jnp.float32) * 0.1
    w2 = jax.random.normal(k3, (P, D), dtype=jnp.float32) * 0.1
    b2 = jax.random.normal(k4, (P,), dtype=jnp.float32) * 0.1

    out = mixer_block(x, gamma, beta, w1, b1, w2, b2)
    out = jax.block_until_ready(out)

    ref = mixer_block_reference(x.astype(jnp.float32), gamma, beta, w1, b1, w2, b2)
    assert out.shape == (B, P, H)
    # bf16 activation I/O + bf16 MXU inputs (f32 accumulate) => loose tolerance
    # vs. the f32 reference (intentional precision trade for HBM bandwidth).
    assert jnp.allclose(out.astype(jnp.float32), ref, atol=5e-2, rtol=5e-2), \
        "mismatch vs reference"

    print("KERNEL_OK")
</pallas_src>

<mosaic_0001>
module attributes {stable_mosaic.version = 11 : i64} {
  func.func @mixer_block_kernel(%arg0: i32, %arg1: memref<4x16x128xbf16, #tpu.memory_space<vmem>>, %arg2: memref<1x128xf32, #tpu.memory_space<vmem>>, %arg3: memref<1x128xf32, #tpu.memory_space<vmem>>, %arg4: memref<64x16xbf16, #tpu.memory_space<vmem>>, %arg5: memref<64x1xf32, #tpu.memory_space<vmem>>, %arg6: memref<16x64xbf16, #tpu.memory_space<vmem>>, %arg7: memref<16x1xf32, #tpu.memory_space<vmem>>, %arg8: memref<4x16x128xbf16, #tpu.memory_space<vmem>>, %arg9: memref<16x512xbf16, #tpu.memory_space<vmem>>) attributes {dimension_semantics = [#tpu.dimension_semantics<parallel>], iteration_bounds = array<i64: 2>, scalar_prefetch = 0 : i64, scratch_operands = 1 : i64, tpu.core_type = #tpu.core_type<tc>, window_params = [{transform_indices = @transform_0, window_bounds = array<i64: 4, 16, 128>}, {pipeline_mode = #tpu.pipeline_mode<synchronous>, transform_indices = @transform_1, window_bounds = array<i64: 1, 128>}, {pipeline_mode = #tpu.pipeline_mode<synchronous>, transform_indices = @transform_2, window_bounds = array<i64: 1, 128>}, {pipeline_mode = #tpu.pipeline_mode<synchronous>, transform_indices = @transform_3, window_bounds = array<i64: 64, 16>}, {pipeline_mode = #tpu.pipeline_mode<synchronous>, transform_indices = @transform_4, window_bounds = array<i64: 64, 1>}, {pipeline_mode = #tpu.pipeline_mode<synchronous>, transform_indices = @transform_5, window_bounds = array<i64: 16, 64>}, {pipeline_mode = #tpu.pipeline_mode<synchronous>, transform_indices = @transform_6, window_bounds = array<i64: 16, 1>}, {transform_indices = @transform_7, window_bounds = array<i64: 4, 16, 128>}]} {
    %c0 = arith.constant 0 : index
    %c0_0 = arith.constant 0 : index
    %0 = vector.load %arg2[%c0, %c0_0] : memref<1x128xf32, #tpu.memory_space<vmem>>, vector<1x128xf32>
    %1 = vector.shape_cast %0 : vector<1x128xf32> to vector<1x128xf32>
    %2 = vector.broadcast %1 : vector<1x128xf32> to vector<16x128xf32>
    %c0_1 = arith.constant 0 : index
    %c0_2 = arith.constant 0 : index
    %3 = vector.load %arg3[%c0_1, %c0_2] : memref<1x128xf32, #tpu.memory_space<vmem>>, vector<1x128xf32>
    %4 = vector.shape_cast %3 : vector<1x128xf32> to vector<1x128xf32>
    %5 = vector.broadcast %4 : vector<1x128xf32> to vector<16x128xf32>
    %c0_3 = arith.constant 0 : index
    %c0_4 = arith.constant 0 : index
    %c0_5 = arith.constant 0 : index
    %6 = vector.load %arg1[%c0_3, %c0_4, %c0_5] : memref<4x16x128xbf16, #tpu.memory_space<vmem>>, vector<1x16x128xbf16>
    %7 = vector.shape_cast %6 : vector<1x16x128xbf16> to vector<16x128xbf16>
    %8 = arith.extf %7 : vector<16x128xbf16> to vector<16x128xf32>
    %cst = arith.constant dense<0.000000e+00> : vector<16xf32>
    %9 = vector.multi_reduction <add>, %8, %cst [1] : vector<16x128xf32> to vector<16xf32>
    %10 = vector.shape_cast %9 : vector<16xf32> to vector<16x1xf32>
    %cst_6 = arith.constant 7.812500e-03 : f32
    %11 = vector.broadcast %cst_6 : f32 to vector<16x1xf32>
    %12 = arith.mulf %10, %11 : vector<16x1xf32>
    %13 = vector.broadcast %12 : vector<16x1xf32> to vector<16x128xf32>
    %14 = arith.subf %8, %13 : vector<16x128xf32>
    %15 = arith.mulf %14, %14 : vector<16x128xf32>
    %cst_7 = arith.constant dense<0.000000e+00> : vector<16xf32>
    %16 = vector.multi_reduction <add>, %15, %cst_7 [1] : vector<16x128xf32> to vector<16xf32>
    %17 = vector.shape_cast %16 : vector<16xf32> to vector<16x1xf32>
    %cst_8 = arith.constant 7.812500e-03 : f32
    %18 = vector.broadcast %cst_8 : f32 to vector<16x1xf32>
    %19 = arith.mulf %17, %18 : vector<16x1xf32>
    %cst_9 = arith.constant 9.99999974E-6 : f32
    %20 = vector.broadcast %cst_9 : f32 to vector<16x1xf32>
    %21 = arith.addf %19, %20 : vector<16x1xf32>
    %22 = math.rsqrt %21 : vector<16x1xf32>
    %23 = vector.broadcast %22 : vector<16x1xf32> to vector<16x128xf32>
    %24 = arith.mulf %14, %23 : vector<16x128xf32>
    %25 = arith.mulf %24, %2 : vector<16x128xf32>
    %26 = arith.addf %25, %5 : vector<16x128xf32>
    %27 = arith.truncf %26 : vector<16x128xf32> to vector<16x128xbf16>
    %c0_10 = arith.constant 0 : index
    %c0_11 = arith.constant 0 : index
    %28 = vector.load %arg9[%c0_10, %c0_11] : memref<16x512xbf16, #tpu.memory_space<vmem>>, vector<16x128xbf16>
    tpu.vector_store %arg9[%c0_10, %c0_11], %27 {strides = array<i32>} : memref<16x512xbf16, #tpu.memory_space<vmem>>, vector<16x128xbf16>,
    %c1 = arith.constant 1 : index
    %c0_12 = arith.constant 0 : index
    %c0_13 = arith.constant 0 : index
    %29 = vector.load %arg1[%c1, %c0_12, %c0_13] : memref<4x16x128xbf16, #tpu.memory_space<vmem>>, vector<1x16x128xbf16>
    %30 = vector.shape_cast %29 : vector<1x16x128xbf16> to vector<16x128xbf16>
    %31 = arith.extf %30 : vector<16x128xbf16> to vector<16x128xf32>
    %cst_14 = arith.constant dense<0.000000e+00> : vector<16xf32>
    %32 = vector.multi_reduction <add>, %31, %cst_14 [1] : vector<16x128xf32> to vector<16xf32>
    %33 = vector.shape_cast %32 : vector<16xf32> to vector<16x1xf32>
    %cst_15 = arith.constant 7.812500e-03 : f32
    %34 = vector.broadcast %cst_15 : f32 to vector<16x1xf32>
    %35 = arith.mulf %33, %34 : vector<16x1xf32>
    %36 = vector.broadcast %35 : vector<16x1xf32> to vector<16x128xf32>
    %37 = arith.subf %31, %36 : vector<16x128xf32>
    %38 = arith.mulf %37, %37 : vector<16x128xf32>
    %cst_16 = arith.constant dense<0.000000e+00> : vector<16xf32>
    %39 = vector.multi_reduction <add>, %38, %cst_16 [1] : vector<16x128xf32> to vector<16xf32>
    %40 = vector.shape_cast %39 : vector<16xf32> to vector<16x1xf32>
    %cst_17 = arith.constant 7.812500e-03 : f32
    %41 = vector.broadcast %cst_17 : f32 to vector<16x1xf32>
    %42 = arith.mulf %40, %41 : vector<16x1xf32>
    %cst_18 = arith.constant 9.99999974E-6 : f32
    %43 = vector.broadcast %cst_18 : f32 to vector<16x1xf32>
    %44 = arith.addf %42, %43 : vector<16x1xf32>
    %45 = math.rsqrt %44 : vector<16x1xf32>
    %46 = vector.broadcast %45 : vector<16x1xf32> to vector<16x128xf32>
    %47 = arith.mulf %37, %46 : vector<16x128xf32>
    %48 = arith.mulf %47, %2 : vector<16x128xf32>
    %49 = arith.addf %48, %5 : vector<16x128xf32>
    %50 = arith.truncf %49 : vector<16x128xf32> to vector<16x128xbf16>
    %c0_19 = arith.constant 0 : index
    %c128 = arith.constant 128 : index
    %51 = vector.load %arg9[%c0_19, %c128] : memref<16x512xbf16, #tpu.memory_space<vmem>>, vector<16x128xbf16>
    tpu.vector_store %arg9[%c0_19, %c128], %50 {strides = array<i32>} : memref<16x512xbf16, #tpu.memory_space<vmem>>, vector<16x128xbf16>,
    %c2 = arith.constant 2 : index
    %c0_20 = arith.constant 0 : index
    %c0_21 = arith.constant 0 : index
    %52 = vector.load %arg1[%c2, %c0_20, %c0_21] : memref<4x16x128xbf16, #tpu.memory_space<vmem>>, vector<1x16x128xbf16>
    %53 = vector.shape_cast %52 : vector<1x16x128xbf16> to vector<16x128xbf16>
    %54 = arith.extf %53 : vector<16x128xbf16> to vector<16x128xf32>
    %cst_22 = arith.constant dense<0.000000e+00> : vector<16xf32>
    %55 = vector.multi_reduction <add>, %54, %cst_22 [1] : vector<16x128xf32> to vector<16xf32>
    %56 = vector.shape_cast %55 : vector<16xf32> to vector<16x1xf32>
    %cst_23 = arith.constant 7.812500e-03 : f32
    %57 = vector.broadcast %cst_23 : f32 to vector<16x1xf32>
    %58 = arith.mulf %56, %57 : vector<16x1xf32>
    %59 = vector.broadcast %58 : vector<16x1xf32> to vector<16x128xf32>
    %60 = arith.subf %54, %59 : vector<16x128xf32>
    %61 = arith.mulf %60, %60 : vector<16x128xf32>
    %cst_24 = arith.constant dense<0.000000e+00> : vector<16xf32>
    %62 = vector.multi_reduction <add>, %61, %cst_24 [1] : vector<16x128xf32> to vector<16xf32>
    %63 = vector.shape_cast %62 : vector<16xf32> to vector<16x1xf32>
    %cst_25 = arith.constant 7.812500e-03 : f32
    %64 = vector.broadcast %cst_25 : f32 to vector<16x1xf32>
    %65 = arith.mulf %63, %64 : vector<16x1xf32>
    %cst_26 = arith.constant 9.99999974E-6 : f32
    %66 = vector.broadcast %cst_26 : f32 to vector<16x1xf32>
    %67 = arith.addf %65, %66 : vector<16x1xf32>
    %68 = math.rsqrt %67 : vector<16x1xf32>
    %69 = vector.broadcast %68 : vector<16x1xf32> to vector<16x128xf32>
    %70 = arith.mulf %60, %69 : vector<16x128xf32>
    %71 = arith.mulf %70, %2 : vector<16x128xf32>
    %72 = arith.addf %71, %5 : vector<16x128xf32>
    %73 = arith.truncf %72 : vector<16x128xf32> to vector<16x128xbf16>
    %c0_27 = arith.constant 0 : index
    %c256 = arith.constant 256 : index
    %74 = vector.load %arg9[%c0_27, %c256] : memref<16x512xbf16, #tpu.memory_space<vmem>>, vector<16x128xbf16>
    tpu.vector_store %arg9[%c0_27, %c256], %73 {strides = array<i32>} : memref<16x512xbf16, #tpu.memory_space<vmem>>, vector<16x128xbf16>,
    %c3 = arith.constant 3 : index
    %c0_28 = arith.constant 0 : index
    %c0_29 = arith.constant 0 : index
    %75 = vector.load %arg1[%c3, %c0_28, %c0_29] : memref<4x16x128xbf16, #tpu.memory_space<vmem>>, vector<1x16x128xbf16>
    %76 = vector.shape_cast %75 : vector<1x16x128xbf16> to vector<16x128xbf16>
    %77 = arith.extf %76 : vector<16x128xbf16> to vector<16x128xf32>
    %cst_30 = arith.constant dense<0.000000e+00> : vector<16xf32>
    %78 = vector.multi_reduction <add>, %77, %cst_30 [1] : vector<16x128xf32> to vector<16xf32>
    %79 = vector.shape_cast %78 : vector<16xf32> to vector<16x1xf32>
    %cst_31 = arith.constant 7.812500e-03 : f32
    %80 = vector.broadcast %cst_31 : f32 to vector<16x1xf32>
    %81 = arith.mulf %79, %80 : vector<16x1xf32>
    %82 = vector.broadcast %81 : vector<16x1xf32> to vector<16x128xf32>
    %83 = arith.subf %77, %82 : vector<16x128xf32>
    %84 = arith.mulf %83, %83 : vector<16x128xf32>
    %cst_32 = arith.constant dense<0.000000e+00> : vector<16xf32>
    %85 = vector.multi_reduction <add>, %84, %cst_32 [1] : vector<16x128xf32> to vector<16xf32>
    %86 = vector.shape_cast %85 : vector<16xf32> to vector<16x1xf32>
    %cst_33 = arith.constant 7.812500e-03 : f32
    %87 = vector.broadcast %cst_33 : f32 to vector<16x1xf32>
    %88 = arith.mulf %86, %87 : vector<16x1xf32>
    %cst_34 = arith.constant 9.99999974E-6 : f32
    %89 = vector.broadcast %cst_34 : f32 to vector<16x1xf32>
    %90 = arith.addf %88, %89 : vector<16x1xf32>
    %91 = math.rsqrt %90 : vector<16x1xf32>
    %92 = vector.broadcast %91 : vector<16x1xf32> to vector<16x128xf32>
    %93 = arith.mulf %83, %92 : vector<16x128xf32>
    %94 = arith.mulf %93, %2 : vector<16x128xf32>
    %95 = arith.addf %94, %5 : vector<16x128xf32>
    %96 = arith.truncf %95 : vector<16x128xf32> to vector<16x128xbf16>
    %c0_35 = arith.constant 0 : index
    %c384 = arith.constant 384 : index
    %97 = vector.load %arg9[%c0_35, %c384] : memref<16x512xbf16, #tpu.memory_space<vmem>>, vector<16x128xbf16>
    tpu.vector_store %arg9[%c0_35, %c384], %96 {strides = array<i32>} : memref<16x512xbf16, #tpu.memory_space<vmem>>, vector<16x128xbf16>,
    %c0_36 = arith.constant 0 : index
    %c0_37 = arith.constant 0 : index
    %98 = vector.load %arg4[%c0_36, %c0_37] : memref<64x16xbf16, #tpu.memory_space<vmem>>, vector<64x16xbf16>
    %c0_38 = arith.constant 0 : index
    %c0_39 = arith.constant 0 : index
    %99 = vector.load %arg9[%c0_38, %c0_39] : memref<16x512xbf16, #tpu.memory_space<vmem>>, vector<16x512xbf16>
    %cst_40 = arith.constant dense<0.000000e+00> : vector<64x512xf32>
    %100 = tpu.matmul %98, %99, %cst_40 {dimension_numbers = #tpu.dot_dimension_numbers<[1], [0], [0], [1], [0, 0, 1, 1], [], []>} : vector<64x16xbf16>, vector<16x512xbf16>, vector<64x512xf32> -> vector<64x512xf32>
    %c0_41 = arith.constant 0 : index
    %c0_42 = arith.constant 0 : index
    %101 = vector.load %arg5[%c0_41, %c0_42] : memref<64x1xf32, #tpu.memory_space<vmem>>, vector<64x1xf32>
    %102 = vector.broadcast %101 : vector<64x1xf32> to vector<64x512xf32>
    %103 = arith.addf %100, %102 : vector<64x512xf32>
    %cst_43 = arith.constant 0.000000e+00 : f32
    %104 = vector.broadcast %cst_43 : f32 to vector<64x512xf32>
    %105 = arith.maximumf %103, %104 : vector<64x512xf32>
    %c0_44 = arith.constant 0 : index
    %c0_45 = arith.constant 0 : index
    %106 = vector.load %arg6[%c0_44, %c0_45] : memref<16x64xbf16, #tpu.memory_space<vmem>>, vector<16x64xbf16>
    %107 = arith.truncf %105 : vector<64x512xf32> to vector<64x512xbf16>
    %cst_46 = arith.constant dense<0.000000e+00> : vector<16x512xf32>
    %108 = tpu.matmul %106, %107, %cst_46 {dimension_numbers = #tpu.dot_dimension_numbers<[1], [0], [0], [1], [0, 0, 1, 1], [], []>} : vector<16x64xbf16>, vector<64x512xbf16>, vector<16x512xf32> -> vector<16x512xf32>
    %c0_47 = arith.constant 0 : index
    %c0_48 = arith.constant 0 : index
    %109 = vector.load %arg7[%c0_47, %c0_48] : memref<16x1xf32, #tpu.memory_space<vmem>>, vector<16x1xf32>
    %110 = vector.broadcast %109 : vector<16x1xf32> to vector<16x512xf32>
    %111 = arith.addf %108, %110 : vector<16x512xf32>
    %c0_49 = arith.constant 0 : index
    %c0_50 = arith.constant 0 : index
    %c0_51 = arith.constant 0 : index
    %112 = vector.load %arg1[%c0_49, %c0_50, %c0_51] : memref<4x16x128xbf16, #tpu.memory_space<vmem>>, vector<1x16x128xbf16>
    %113 = vector.shape_cast %112 : vector<1x16x128xbf16> to vector<16x128xbf16>
    %114 = arith.extf %113 : vector<16x128xbf16> to vector<16x128xf32>
    %115 = vector.extract_strided_slice %111 {offsets = [0, 0], sizes = [16, 128], strides = [1, 1]} : vector<16x512xf32> to vector<16x128xf32>
    %116 = arith.addf %114, %115 : vector<16x128xf32>
    %117 = arith.truncf %116 : vector<16x128xf32> to vector<16x128xbf16>
    %c0_52 = arith.constant 0 : index
    %c0_53 = arith.constant 0 : index
    %c0_54 = arith.constant 0 : index
    %118 = vector.load %arg8[%c0_52, %c0_53, %c0_54] : memref<4x16x128xbf16, #tpu.memory_space<vmem>>, vector<1x16x128xbf16>
    %119 = vector.shape_cast %118 : vector<1x16x128xbf16> to vector<16x128xbf16>
    %120 = vector.shape_cast %117 : vector<16x128xbf16> to vector<1x16x128xbf16>
    tpu.vector_store %arg8[%c0_52, %c0_53, %c0_54], %120 {strides = array<i32>} : memref<4x16x128xbf16, #tpu.memory_space<vmem>>, vector<1x16x128xbf16>,
    %c1_55 = arith.constant 1 : index
    %c0_56 = arith.constant 0 : index
    %c0_57 = arith.constant 0 : index
    %121 = vector.load %arg1[%c1_55, %c0_56, %c0_57] : memref<4x16x128xbf16, #tpu.memory_space<vmem>>, vector<1x16x128xbf16>
    %122 = vector.shape_cast %121 : vector<1x16x128xbf16> to vector<16x128xbf16>
    %123 = arith.extf %122 : vector<16x128xbf16> to vector<16x128xf32>
    %124 = vector.extract_strided_slice %111 {offsets = [0, 128], sizes = [16, 128], strides = [1, 1]} : vector<16x512xf32> to vector<16x128xf32>
    %125 = arith.addf %123, %124 : vector<16x128xf32>
    %126 = arith.truncf %125 : vector<16x128xf32> to vector<16x128xbf16>
    %c1_58 = arith.constant 1 : index
    %c0_59 = arith.constant 0 : index
    %c0_60 = arith.constant 0 : index
    %127 = vector.load %arg8[%c1_58, %c0_59, %c0_60] : memref<4x16x128xbf16, #tpu.memory_space<vmem>>, vector<1x16x128xbf16>
    %128 = vector.shape_cast %127 : vector<1x16x128xbf16> to vector<16x128xbf16>
    %129 = vector.shape_cast %126 : vector<16x128xbf16> to vector<1x16x128xbf16>
    tpu.vector_store %arg8[%c1_58, %c0_59, %c0_60], %129 {strides = array<i32>} : memref<4x16x128xbf16, #tpu.memory_space<vmem>>, vector<1x16x128xbf16>,
    %c2_61 = arith.constant 2 : index
    %c0_62 = arith.constant 0 : index
    %c0_63 = arith.constant 0 : index
    %130 = vector.load %arg1[%c2_61, %c0_62, %c0_63] : memref<4x16x128xbf16, #tpu.memory_space<vmem>>, vector<1x16x128xbf16>
    %131 = vector.shape_cast %130 : vector<1x16x128xbf16> to vector<16x128xbf16>
    %132 = arith.extf %131 : vector<16x128xbf16> to vector<16x128xf32>
    %133 = vector.extract_strided_slice %111 {offsets = [0, 256], sizes = [16, 128], strides = [1, 1]} : vector<16x512xf32> to vector<16x128xf32>
    %134 = arith.addf %132, %133 : vector<16x128xf32>
    %135 = arith.truncf %134 : vector<16x128xf32> to vector<16x128xbf16>
    %c2_64 = arith.constant 2 : index
    %c0_65 = arith.constant 0 : index
    %c0_66 = arith.constant 0 : index
    %136 = vector.load %arg8[%c2_64, %c0_65, %c0_66] : memref<4x16x128xbf16, #tpu.memory_space<vmem>>, vector<1x16x128xbf16>
    %137 = vector.shape_cast %136 : vector<1x16x128xbf16> to vector<16x128xbf16>
    %138 = vector.shape_cast %135 : vector<16x128xbf16> to vector<1x16x128xbf16>
    tpu.vector_store %arg8[%c2_64, %c0_65, %c0_66], %138 {strides = array<i32>} : memref<4x16x128xbf16, #tpu.memory_space<vmem>>, vector<1x16x128xbf16>,
    %c3_67 = arith.constant 3 : index
    %c0_68 = arith.constant 0 : index
    %c0_69 = arith.constant 0 : index
    %139 = vector.load %arg1[%c3_67, %c0_68, %c0_69] : memref<4x16x128xbf16, #tpu.memory_space<vmem>>, vector<1x16x128xbf16>
    %140 = vector.shape_cast %139 : vector<1x16x128xbf16> to vector<16x128xbf16>
    %141 = arith.extf %140 : vector<16x128xbf16> to vector<16x128xf32>
    %142 = vector.extract_strided_slice %111 {offsets = [0, 384], sizes = [16, 128], strides = [1, 1]} : vector<16x512xf32> to vector<16x128xf32>
    %143 = arith.addf %141, %142 : vector<16x128xf32>
    %144 = arith.truncf %143 : vector<16x128xf32> to vector<16x128xbf16>
    %c3_70 = arith.constant 3 : index
    %c0_71 = arith.constant 0 : index
    %c0_72 = arith.constant 0 : index
    %145 = vector.load %arg8[%c3_70, %c0_71, %c0_72] : memref<4x16x128xbf16, #tpu.memory_space<vmem>>, vector<1x16x128xbf16>
    %146 = vector.shape_cast %145 : vector<1x16x128xbf16> to vector<16x128xbf16>
    %147 = vector.shape_cast %144 : vector<16x128xbf16> to vector<1x16x128xbf16>
    tpu.vector_store %arg8[%c3_70, %c0_71, %c0_72], %147 {strides = array<i32>} : memref<4x16x128xbf16, #tpu.memory_space<vmem>>, vector<1x16x128xbf16>,
    return
  }
  func.func @transform_0(%arg0: i32) -> (i32, i32, i32) {
    %c0_i32 = arith.constant 0 : i32
    %c0_i32_0 = arith.constant 0 : i32
    %c0_i32_1 = arith.constant 0 : i32
    return %arg0, %c0_i32, %c0_i32_0 : i32, i32, i32
  }
  func.func @transform_1(%arg0: i32) -> (i32, i32) {
    %c0_i32 = arith.constant 0 : i32
    %c0_i32_0 = arith.constant 0 : i32
    %c0_i32_1 = arith.constant 0 : i32
    return %c0_i32, %c0_i32_0 : i32, i32
  }
  func.func @transform_2(%arg0: i32) -> (i32, i32) {
    %c0_i32 = arith.constant 0 : i32
    %c0_i32_0 = arith.constant 0 : i32
    %c0_i32_1 = arith.constant 0 : i32
    return %c0_i32, %c0_i32_0 : i32, i32
  }
  func.func @transform_3(%arg0: i32) -> (i32, i32) {
    %c0_i32 = arith.constant 0 : i32
    %c0_i32_0 = arith.constant 0 : i32
    %c0_i32_1 = arith.constant 0 : i32
    return %c0_i32, %c0_i32_0 : i32, i32
  }
  func.func @transform_4(%arg0: i32) -> (i32, i32) {
    %c0_i32 = arith.constant 0 : i32
    %c0_i32_0 = arith.constant 0 : i32
    %c0_i32_1 = arith.constant 0 : i32
    return %c0_i32, %c0_i32_0 : i32, i32
  }
  func.func @transform_5(%arg0: i32) -> (i32, i32) {
    %c0_i32 = arith.constant 0 : i32
    %c0_i32_0 = arith.constant 0 : i32
    %c0_i32_1 = arith.constant 0 : i32
    return %c0_i32, %c0_i32_0 : i32, i32
  }
  func.func @transform_6(%arg0: i32) -> (i32, i32) {
    %c0_i32 = arith.constant 0 : i32
    %c0_i32_0 = arith.constant 0 : i32
    %c0_i32_1 = arith.constant 0 : i32
    return %c0_i32, %c0_i32_0 : i32, i32
  }
  func.func @transform_7(%arg0: i32) -> (i32, i32, i32) {
    %c0_i32 = arith.constant 0 : i32
    %c0_i32_0 = arith.constant 0 : i32
    %c0_i32_1 = arith.constant 0 : i32
    return %arg0, %c0_i32, %c0_i32_0 : i32, i32, i32
  }
}

</mosaic_0001>

<llo_original>
// kernel: tpu_custom_call.1
$region0: #{tpu_custom_call.1}
  #allocation0 [shape = 'u32[]', space=smem, size = 0x4, offset = 0x4, fixed_abs, tag = 'smem constant byte address 0x4 - core index']
  #allocation1 [shape = 'u32[144,128]{1,0:T(1,128)}', space=vmem, size = 0x12000, scoped, tag = 'internal scratch']
  #allocation2 [shape = 'bf16[16,512]{1,0:T(8,128)(2,1)}', space=vmem, size = 0x4000, scoped, tag = 'scratch operand']
  %s0 = inlined_call_operand.vmem [shape: bf16[8,16,128], index: 0, kind: input, shape index: {}]
  %s1 = inlined_call_operand.vmem [shape: f32[1,128], index: 1, kind: input, shape index: {}]
  %s2 = inlined_call_operand.vmem [shape: f32[1,128], index: 2, kind: input, shape index: {}]
  %s3 = inlined_call_operand.vmem [shape: bf16[64,16], index: 3, kind: input, shape index: {}]
  %s4 = inlined_call_operand.vmem [shape: f32[64,1], index: 4, kind: input, shape index: {}]
  %s5 = inlined_call_operand.vmem [shape: bf16[16,64], index: 5, kind: input, shape index: {}]
  %s6 = inlined_call_operand.vmem [shape: f32[16,1], index: 6, kind: input, shape index: {}]
  %s7 = inlined_call_operand.hbm [shape: bf16[8,16,128], index: 7, kind: output, shape index: {}]
  %s8 = sld [smem:[#allocation0]]
  $region61: #{tpu_custom_call.1} parent=0
    _
  %s10 = ssub.s32 1, %s8
  %s11 = scalar_select 0, %s10, %s8
  $region1: #{tpu_custom_call.1} parent=0
    #allocation3 [shape = 'u8[32768]{0}', space=vmem, size = 0x8000, scoped, tag = 'output window, operand 0']
    #allocation4 [shape = 's32[2]{0}', space=sflag, size = 0x8, scoped, tag = 'scoped memory for tpu_custom_call.1']
    %12 = vsyncpa [#allocation4], 0
    %s13 = scalar_lea.sflag [#allocation4], 1
    %14 = vsyncpa %s13, 0
    loop: start=0, step=1, limit=4
    $region2: #{tpu_custom_call.1} parent=1 // loop_pre_header
      _
    $region3: #{tpu_custom_call.1} parent=1 // loop_header
      %s16 = sphi 0, %s20
      %p17 = scmp.ge.s32.totalorder %s16, 4
      %s26 = sphi 0, %s28
      %s29 = sphi 0, %s26
      %s30 = sphi 0, %s29
      %s46 = sphi 0, %s30
      %s50 = sphi 0, %s50
      %s52 = sphi 0, %s50
      %s53 = sphi 0, %s52
      %s67 = sphi 0, %s53
      %s71 = sphi 0, %s71
      %s73 = sphi 0, %s71
      %s74 = sphi 0, %s73
      %s88 = sphi 0, %s74
      %s92 = sphi 0, %s92
      %s94 = sphi 0, %s92
      %s95 = sphi 0, %s94
      %s109 = sphi 0, %s95
      %s113 = sphi 0, %s113
      %s115 = sphi 0, %s113
      %s116 = sphi 0, %s115
      %s130 = sphi 0, %s116
      %s134 = sphi 0, %s134
      %s136 = sphi 0, %s134
      %s137 = sphi 0, %s136
      %s151 = sphi 0, %s137
      %s155 = sphi 0, %s155
      %s157 = sphi 0, %s155
      %s158 = sphi 0, %s157
      %s172 = sphi 0, %s158
      %s178 = sphi 0, %s180
      %s181 = sphi 0, %s178
      %s182 = sphi 0, %s181
      %s198 = sphi 0, %s182
    $region4: #{tpu_custom_call.1} parent=1 // loop_header_branch
      %19 = sbr.rel (%p17) target = $region8
    $region5: #{tpu_custom_call.1} parent=1 // loop_body
      %s21 = ssub.s32 %s16, 1
      %s22 = ssub.s32 %s16, 2
      %s23 = sadd.s32 %s16, 1
      %s24 = ssub.s32 %s16, %s23
      %p25 = scmp.eq.s32.totalorder %s24, 0
      %s27 = sadd.s32 %s26, 1
      %s28 = scalar_select %p25, %s26, %s27
      %p31 = pneg %p25
      %p32 = scmp.eq.s32.totalorder %s16, 1
      %p33 = por %p31, %p32
      %p34 = scmp.ne.s32.totalorder %s26, %s29
      %p35 = scmp.eq.s32.totalorder %s16, 0
      %p36 = por %p34, %p35
      %p37 = scmp.ne.s32.totalorder %s26, %s29
      %p38 = scmp.eq.s32.totalorder %s21, 1
      %p39 = por %p37, %p38
      %p40 = scmp.ne.s32.totalorder %s29, %s30
      %p41 = scmp.eq.s32.totalorder %s21, 0
      %p42 = por %p40, %p41
      %p43 = scmp.ne.s32.totalorder %s29, %s30
      %p44 = scmp.eq.s32.totalorder %s22, 1
      %p45 = por %p43, %p44
      %p47 = scmp.ne.s32.totalorder %s30, %s46
      %p48 = scmp.eq.s32.totalorder %s22, 0
      %p49 = por %p47, %p48
      %s51 = sadd.s32 %s50, 1
      %p54 = scmp.eq.s32.totalorder %s16, 1
      %p55 = scmp.ne.s32.totalorder %s50, %s52
      %p56 = scmp.eq.s32.totalorder %s16, 0
      %p57 = por %p55, %p56
      %p58 = scmp.ne.s32.totalorder %s50, %s52
      %p59 = scmp.eq.s32.totalorder %s21, 1
      %p60 = por %p58, %p59
      %p61 = scmp.ne.s32.totalorder %s52, %s53
      %p62 = scmp.eq.s32.totalorder %s21, 0
      %p63 = por %p61, %p62
      %p64 = scmp.ne.s32.totalorder %s52, %s53
      %p65 = scmp.eq.s32.totalorder %s22, 1
      %p66 = por %p64, %p65
      %p68 = scmp.ne.s32.totalorder %s53, %s67
      %p69 = scmp.eq.s32.totalorder %s22, 0
      %p70 = por %p68, %p69
      %s72 = sadd.s32 %s71, 1
      %p75 = scmp.eq.s32.totalorder %s16, 1
      %p76 = scmp.ne.s32.totalorder %s71, %s73
      %p77 = scmp.eq.s32.totalorder %s16, 0
      %p78 = por %p76, %p77
      %p79 = scmp.ne.s32.totalorder %s71, %s73
      %p80 = scmp.eq.s32.totalorder %s21, 1
      %p81 = por %p79, %p80
      %p82 = scmp.ne.s32.totalorder %s73, %s74
      %p83 = scmp.eq.s32.totalorder %s21, 0
      %p84 = por %p82, %p83
      %p85 = scmp.ne.s32.totalorder %s73, %s74
      %p86 = scmp.eq.s32.totalorder %s22, 1
      %p87 = por %p85, %p86
      %p89 = scmp.ne.s32.totalorder %s74, %s88
      %p90 = scmp.eq.s32.totalorder %s22, 0
      %p91 = por %p89, %p90
      %s93 = sadd.s32 %s92, 1
      %p96 = scmp.eq.s32.totalorder %s16, 1
      %p97 = scmp.ne.s32.totalorder %s92, %s94
      %p98 = scmp.eq.s32.totalorder %s16, 0
      %p99 = por %p97, %p98
      %p100 = scmp.ne.s32.totalorder %s92, %s94
      %p101 = scmp.eq.s32.totalorder %s21, 1
      %p102 = por %p100, %p101
      %p103 = scmp.ne.s32.totalorder %s94, %s95
      %p104 = scmp.eq.s32.totalorder %s21, 0
      %p105 = por %p103, %p104
      %p106 = scmp.ne.s32.totalorder %s94, %s95
      %p107 = scmp.eq.s32.totalorder %s22, 1
      %p108 = por %p106, %p107
      %p110 = scmp.ne.s32.totalorder %s95, %s109
      %p111 = scmp.eq.s32.totalorder %s22, 0
      %p112 = por %p110, %p111
      %s114 = sadd.s32 %s113, 1
      %p117 = scmp.eq.s32.totalorder %s16, 1
      %p118 = scmp.ne.s32.totalorder %s113, %s115
      %p119 = scmp.eq.s32.totalorder %s16, 0
      %p120 = por %p118, %p119
      %p121 = scmp.ne.s32.totalorder %s113, %s115
      %p122 = scmp.eq.s32.totalorder %s21, 1
      %p123 = por %p121, %p122
      %p124 = scmp.ne.s32.totalorder %s115, %s116
      %p125 = scmp.eq.s32.totalorder %s21, 0
      %p126 = por %p124, %p125
      %p127 = scmp.ne.s32.totalorder %s115, %s116
      %p128 = scmp.eq.s32.totalorder %s22, 1
      %p129 = por %p127, %p128
      %p131 = scmp.ne.s32.totalorder %s116, %s130
      %p132 = scmp.eq.s32.totalorder %s22, 0
      %p133 = por %p131, %p132
      %s135 = sadd.s32 %s134, 1
      %p138 = scmp.eq.s32.totalorder %s16, 1
      %p139 = scmp.ne.s32.totalorder %s134, %s136
      %p140 = scmp.eq.s32.totalorder %s16, 0
      %p141 = por %p139, %p140
      %p142 = scmp.ne.s32.totalorder %s134, %s136
      %p143 = scmp.eq.s32.totalorder %s21, 1
      %p144 = por %p142, %p143
      %p145 = scmp.ne.s32.totalorder %s136, %s137
      %p146 = scmp.eq.s32.totalorder %s21, 0
      %p147 = por %p145, %p146
      %p148 = scmp.ne.s32.totalorder %s136, %s137
      %p149 = scmp.eq.s32.totalorder %s22, 1
      %p150 = por %p148, %p149
      %p152 = scmp.ne.s32.totalorder %s137, %s151
      %p153 = scmp.eq.s32.totalorder %s22, 0
      %p154 = por %p152, %p153
      %s156 = sadd.s32 %s155, 1
      %p159 = scmp.eq.s32.totalorder %s16, 1
      %p160 = scmp.ne.s32.totalorder %s155, %s157
      %p161 = scmp.eq.s32.totalorder %s16, 0
      %p162 = por %p160, %p161
      %p163 = scmp.ne.s32.totalorder %s155, %s157
      %p164 = scmp.eq.s32.totalorder %s21, 1
      %p165 = por %p163, %p164
      %p166 = scmp.ne.s32.totalorder %s157, %s158
      %p167 = scmp.eq.s32.totalorder %s21, 0
      %p168 = por %p166, %p167
      %p169 = scmp.ne.s32.totalorder %s157, %s158
      %p170 = scmp.eq.s32.totalorder %s22, 1
      %p171 = por %p169, %p170
      %p173 = scmp.ne.s32.totalorder %s158, %s172
      %p174 = scmp.eq.s32.totalorder %s22, 0
      %p175 = por %p173, %p174
      %s176 = ssub.s32 %s16, %s23
      %p177 = scmp.eq.s32.totalorder %s176, 0
      %s179 = sadd.s32 %s178, 1
      %s180 = scalar_select %p177, %s178, %s179
      %p183 = pneg %p177
      %p184 = scmp.eq.s32.totalorder %s16, 1
      %p185 = por %p183, %p184
      %p186 = scmp.ne.s32.totalorder %s178, %s181
      %p187 = scmp.eq.s32.totalorder %s16, 0
      %p188 = por %p186, %p187
      %p189 = scmp.ne.s32.totalorder %s178, %s181
      %p190 = scmp.eq.s32.totalorder %s21, 1
      %p191 = por %p189, %p190
      %p192 = scmp.ne.s32.totalorder %s181, %s182
      %p193 = scmp.eq.s32.totalorder %s21, 0
      %p194 = por %p192, %p193
      %p195 = scmp.ne.s32.totalorder %s181, %s182
      %p196 = scmp.eq.s32.totalorder %s22, 1
      %p197 = por %p195, %p196
      %p199 = scmp.ne.s32.totalorder %s182, %s198
      %p200 = scmp.eq.s32.totalorder %s22, 0
      %p201 = por %p199, %p200
      %p202 = scmp.le.s32.totalorder 1, %s16
      %p203 = scmp.lt.s32.totalorder %s16, 3
      %p204 = pnand %p202, %p203
      %p205 = pneg %p204
      // Predicated region
      $region9: #{tpu_custom_call.1} parent=5 // pred_check
        _
      $region10: #{tpu_custom_call.1} parent=5 // pred_check_branch
        %207 = sbr.rel (%p204) target = $region12
      $region11: #{tpu_custom_call.1} parent=5 // pred_region
        %s208 = ssub.s32 %s16, 1
        // Predicated region
        $region13: #{tpu_custom_call.1} parent=11 // pred_check
          %p209 = pneg %p63
        $region14: #{tpu_custom_call.1} parent=11 // pred_check_branch
          %211 = sbr.rel (%p209) target = $region16
        $region15: #{tpu_custom_call.1} parent=11 // pred_region
          _
        $region16: #{tpu_custom_call.1} parent=11 // pred_fallthru
          _
        // Predicated region
        $region17: #{tpu_custom_call.1} parent=11 // pred_check
          %p212 = pneg %p84
        $region18: #{tpu_custom_call.1} parent=11 // pred_check_branch
          %214 = sbr.rel (%p212) target = $region20
        $region19: #{tpu_custom_call.1} parent=11 // pred_region
          _
        $region20: #{tpu_custom_call.1} parent=11 // pred_fallthru
          _
        // Predicated region
        $region21: #{tpu_custom_call.1} parent=11 // pred_check
          %p215 = pneg %p105
        $region22: #{tpu_custom_call.1} parent=11 // pred_check_branch
          %217 = sbr.rel (%p215) target = $region24
        $region23: #{tpu_custom_call.1} parent=11 // pred_region
          _
        $region24: #{tpu_custom_call.1} parent=11 // pred_fallthru
          _
        // Predicated region
        $region25: #{tpu_custom_call.1} parent=11 // pred_check
          %p218 = pneg %p126
        $region26: #{tpu_custom_call.1} parent=11 // pred_check_branch
          %220 = sbr.rel (%p218) target = $region28
        $region27: #{tpu_custom_call.1} parent=11 // pred_region
          _
        $region28: #{tpu_custom_call.1} parent=11 // pred_fallthru
          _
        // Predicated region
        $region29: #{tpu_custom_call.1} parent=11 // pred_check
          %p221 = pneg %p147
        $region30: #{tpu_custom_call.1} parent=11 // pred_check_branch
          %223 = sbr.rel (%p221) target = $region32
        $region31: #{tpu_custom_call.1} parent=11 // pred_region
          _
        $region32: #{tpu_custom_call.1} parent=11 // pred_fallthru
          _
        // Predicated region
        $region33: #{tpu_custom_call.1} parent=11 // pred_check
          %p224 = pneg %p168
        $region34: #{tpu_custom_call.1} parent=11 // pred_check_branch
          %226 = sbr.rel (%p224) target = $region36
        $region35: #{tpu_custom_call.1} parent=11 // pred_region
          _
        $region36: #{tpu_custom_call.1} parent=11 // pred_fallthru
          _
      $region12: #{tpu_custom_call.1} parent=5 // pred_fallthru
        _
      %p227 = scmp.lt.s32.totalorder %s16, 2
      // Predicated region
      $region37: #{tpu_custom_call.1} parent=5 // pred_check
        %p228 = pneg %p227
      $region38: #{tpu_custom_call.1} parent=5 // pred_check_branch
        %230 = sbr.rel (%p228) target = $region40
      $region39: #{tpu_custom_call.1} parent=5 // pred_region
        // Predicated region
        $region41: #{tpu_custom_call.1} parent=39 // pred_check
          %p231 = pneg %p36
        $region42: #{tpu_custom_call.1} parent=39 // pred_check_branch
          %233 = sbr.rel (%p231) target = $region44
        $region43: #{tpu_custom_call.1} parent=39 // pred_region
          %s234 = smul.u32 4, %s16
          %p235 = scmp.lt.s32.totalorder %s234, 7
          %s236 = scalar_select %p235, %s234, 7
          %s237 = smul.addr %s236, 2
          %s238 = smul.addr %s237, 4
          %s239 = scalar_lea.vmem %s0, %s238
          %s240 = smul.u32 4, %s16
        $region44: #{tpu_custom_call.1} parent=39 // pred_fallthru
          _
      $region40: #{tpu_custom_call.1} parent=5 // pred_fallthru
        _
      %p241 = scmp.le.s32.totalorder 1, %s16
      %p242 = scmp.lt.s32.totalorder %s16, 3
      %p243 = pnand %p241, %p242
      %p244 = pneg %p243
      // Predicated region
      $region45: #{tpu_custom_call.1} parent=5 // pred_check
        _
      $region46: #{tpu_custom_call.1} parent=5 // pred_check_branch
        %246 = sbr.rel (%p243) target = $region48
      $region47: #{tpu_custom_call.1} parent=5 // pred_region
        %s247 = ssub.s32 %s16, 1
        %s248 = smul.u32 4, %s21
        %p249 = scmp.lt.s32.totalorder %s248, 7
        %s250 = scalar_select %p249, %s248, 7
        %s251 = smul.addr %s250, 2
        %s252 = smul.addr %s251, 4
        %s253 = scalar_lea.vmem %s0, %s252
        %p254 = pneg %p42
        %p255 = pneg %p39
        %p256 = pneg %p63
        %p257 = pneg %p60
        %p258 = pneg %p84
        %p259 = pneg %p81
        %p260 = pneg %p105
        %p261 = pneg %p102
        %p262 = pneg %p126
        %p263 = pneg %p123
        %p264 = pneg %p147
        %p265 = pneg %p144
        %p266 = pneg %p168
        %p267 = pneg %p165
        %p268 = pneg %p194
        %p269 = pneg %p191
        %s270 = sand.u32 %s181, 1
        %s271 = scalar_lea.sflag [#allocation4], %s270
        %s272 = sand.u32 %s181, 1
        %s273 = smul.addr %s272, 32
        %s274 = scalar_lea.vmem [#allocation3], %s273
        %s275 = smul.u32 4, %s21
        %p276 = scmp.lt.s32.totalorder %s275, 7
        %s277 = scalar_select %p276, %s275, 7
        %s278 = smul.addr %s277, 2
        %s279 = smul.addr %s278, 4
        %s280 = scalar_lea.vmem %s0, %s279
        %s281 = smul.u32 4, %s21
        %s282 = smul.u32 4, %s21
        %v284 = vld [vmem:[%s1] sm:$0x1]
        %v286 = vlaneseq
        %v287 = vshrl.u32 %v286, 7
        %v288 = vsub.s32 0, %v287
        %v289 = vrot.slane %v284, %v288
        %v291 = vld [vmem:[%s2] sm:$0x1]
        %v293 = vlaneseq
        %v294 = vshrl.u32 %v293, 7
        %v295 = vsub.s32 0, %v294
        %v296 = vrot.slane %v291, %v295
        %v298 = vld [vmem:[%s280] sm:$0xf]
        %v299 = vld [vmem:[%s280 + $0x4] sm:$0xf]
        %v300 = vunpack.c.l.bf16 %v298
        %v301 = vunpack.c.l.bf16 %v299
        %302 = vadd.xlane.f32.xlu0 %v300
        %v303 = vpop.xlane.xlu0 %302
        %304 = vadd.xlane.f32.xlu0 %v301
        %v305 = vpop.xlane.xlu0 %304
        %v306 = vmul.f32 %v303, 0.0078125
        %v307 = vmul.f32 %v305, 0.0078125
        %v308 = vsub.f32 %v300, %v306
        %v309 = vsub.f32 %v301, %v307
        %v310 = vmul.f32 %v308, %v308
        %v311 = vmul.f32 %v309, %v309
        %312 = vadd.xlane.f32.xlu0 %v310
        %v313 = vpop.xlane.xlu0 %312
        %314 = vadd.xlane.f32.xlu0 %v311
        %v315 = vpop.xlane.xlu0 %314
        %v316 = vmul.f32 %v313, 0.0078125
        %v317 = vmul.f32 %v315, 0.0078125
        %v318 = vadd.f32 %v316, 1e-05
        %v319 = vadd.f32 %v317, 1e-05
        %v320 = vrsqrt.pop %v318
        %v321 = vrsqrt.pop %v319
        %v322 = vmul.f32 %v308, %v320
        %v323 = vmul.f32 %v309, %v321
        %v324 = vmul.f32 %v322, %v289
        %v325 = vmul.f32 %v323, %v289
        %v326 = vadd.f32 %v324, %v296
        %v327 = vadd.f32 %v325, %v296
        %v328 = vpack.c.bf16 %v327, %v326
        %v330 = vunpack.c.l.b16 %v328
        %v331 = vunpack.c.h.b16 %v328
        %v332 = vpack.c.b16 %v330, %v330
        %v333 = vpack.c.b16 %v331, %v331
        %336 = vst [vmem:[#allocation2] sm:$0xf] %v332
        %337 = vst [vmem:[#allocation2 + $0x10] sm:$0xf] %v333
        %s338 = scalar_lea.vmem %s280, 8
        %v339 = vld [vmem:[%s338] sm:$0xf]
        %v340 = vld [vmem:[%s338 + $0x4] sm:$0xf]
        %v341 = vunpack.c.l.bf16 %v339
        %v342 = vunpack.c.l.bf16 %v340
        %343 = vadd.xlane.f32.xlu0 %v341
        %v344 = vpop.xlane.xlu0 %343
        %345 = vadd.xlane.f32.xlu0 %v342
        %v346 = vpop.xlane.xlu0 %345
        %v347 = vmul.f32 %v344, 0.0078125
        %v348 = vmul.f32 %v346, 0.0078125
        %v349 = vsub.f32 %v341, %v347
        %v350 = vsub.f32 %v342, %v348
        %v351 = vmul.f32 %v349, %v349
        %v352 = vmul.f32 %v350, %v350
        %353 = vadd.xlane.f32.xlu0 %v351
        %v354 = vpop.xlane.xlu0 %353
        %355 = vadd.xlane.f32.xlu0 %v352
        %v356 = vpop.xlane.xlu0 %355
        %v357 = vmul.f32 %v354, 0.0078125
        %v358 = vmul.f32 %v356, 0.0078125
        %v359 = vadd.f32 %v357, 1e-05
        %v360 = vadd.f32 %v358, 1e-05
        %v361 = vrsqrt.pop %v359
        %v362 = vrsqrt.pop %v360
        %v363 = vmul.f32 %v349, %v361
        %v364 = vmul.f32 %v350, %v362
        %v365 = vmul.f32 %v363, %v289
        %v366 = vmul.f32 %v364, %v289
        %v367 = vadd.f32 %v365, %v296
        %v368 = vadd.f32 %v366, %v296
        %v369 = vpack.c.bf16 %v368, %v367
        %v371 = vunpack.c.l.b16 %v369
        %v372 = vunpack.c.h.b16 %v369
        %v373 = vpack.c.b16 %v371, %v371
        %v374 = vpack.c.b16 %v372, %v372
        %377 = vst [vmem:[#allocation2 + $0x4] sm:$0xf] %v373
        %378 = vst [vmem:[#allocation2 + $0x14] sm:$0xf] %v374
        %s379 = scalar_lea.vmem %s280, 16
        %v380 = vld [vmem:[%s379] sm:$0xf]
        %v381 = vld [vmem:[%s379 + $0x4] sm:$0xf]
        %v382 = vunpack.c.l.bf16 %v380
        %v383 = vunpack.c.l.bf16 %v381
        %384 = vadd.xlane.f32.xlu0 %v382
        %v385 = vpop.xlane.xlu0 %384
        %386 = vadd.xlane.f32.xlu0 %v383
        %v387 = vpop.xlane.xlu0 %386
        %v388 = vmul.f32 %v385, 0.0078125
        %v389 = vmul.f32 %v387, 0.0078125
        %v390 = vsub.f32 %v382, %v388
        %v391 = vsub.f32 %v383, %v389
        %v392 = vmul.f32 %v390, %v390
        %v393 = vmul.f32 %v391, %v391
        %394 = vadd.xlane.f32.xlu0 %v392
        %v395 = vpop.xlane.xlu0 %394
        %396 = vadd.xlane.f32.xlu0 %v393
        %v397 = vpop.xlane.xlu0 %396
        %v398 = vmul.f32 %v395, 0.0078125
        %v399 = vmul.f32 %v397, 0.0078125
        %v400 = vadd.f32 %v398, 1e-05
        %v401 = vadd.f32 %v399, 1e-05
        %v402 = vrsqrt.pop %v400
        %v403 = vrsqrt.pop %v401
        %v404 = vmul.f32 %v390, %v402
        %v405 = vmul.f32 %v391, %v403
        %v406 = vmul.f32 %v404, %v289
        %v407 = vmul.f32 %v405, %v289
        %v408 = vadd.f32 %v406, %v296
        %v409 = vadd.f32 %v407, %v296
        %v410 = vpack.c.bf16 %v409, %v408
        %v412 = vunpack.c.l.b16 %v410
        %v413 = vunpack.c.h.b16 %v410
        %v414 = vpack.c.b16 %v412, %v412
        %v415 = vpack.c.b16 %v413, %v413
        %418 = vst [vmem:[#allocation2 + $0x8] sm:$0xf] %v414
        %419 = vst [vmem:[#allocation2 + $0x18] sm:$0xf] %v415
        %s420 = scalar_lea.vmem %s280, 24
        %v421 = vld [vmem:[%s420] sm:$0xf]
        %v422 = vld [vmem:[%s420 + $0x4] sm:$0xf]
        %v423 = vunpack.c.l.bf16 %v421
        %v424 = vunpack.c.l.bf16 %v422
        %425 = vadd.xlane.f32.xlu0 %v423
        %v426 = vpop.xlane.xlu0 %425
        %427 = vadd.xlane.f32.xlu0 %v424
        %v428 = vpop.xlane.xlu0 %427
        %v429 = vmul.f32 %v426, 0.0078125
        %v430 = vmul.f32 %v428, 0.0078125
        %v431 = vsub.f32 %v423, %v429
        %v432 = vsub.f32 %v424, %v430
        %v433 = vmul.f32 %v431, %v431
        %v434 = vmul.f32 %v432, %v432
        %435 = vadd.xlane.f32.xlu0 %v433
        %v436 = vpop.xlane.xlu0 %435
        %437 = vadd.xlane.f32.xlu0 %v434
        %v438 = vpop.xlane.xlu0 %437
        %v439 = vmul.f32 %v436, 0.0078125
        %v440 = vmul.f32 %v438, 0.0078125
        %v441 = vadd.f32 %v439, 1e-05
        %v442 = vadd.f32 %v440, 1e-05
        %v443 = vrsqrt.pop %v441
        %v444 = vrsqrt.pop %v442
        %v445 = vmul.f32 %v431, %v443
        %v446 = vmul.f32 %v432, %v444
        %v447 = vmul.f32 %v445, %v289
        %v448 = vmul.f32 %v446, %v289
        %v449 = vadd.f32 %v447, %v296
        %v450 = vadd.f32 %v448, %v296
        %v451 = vpack.c.bf16 %v450, %v449
        %v453 = vunpack.c.l.b16 %v451
        %v454 = vunpack.c.h.b16 %v451
        %v455 = vpack.c.b16 %v453, %v453
        %v456 = vpack.c.b16 %v454, %v454
        %459 = vst [vmem:[#allocation2 + $0xc] sm:$0xf] %v455
        %460 = vst [vmem:[#allocation2 + $0x1c] sm:$0xf] %v456
        %v461 = vld [vmem:[%s3] sm:$0xf]
        %v462 = vld [vmem:[%s3 + $0x4] sm:$0xf]
        %v463 = vld [vmem:[%s3 + $0x8] sm:$0xf]
        %v464 = vld [vmem:[%s3 + $0xc] sm:$0xf]
        %v465 = vld [vmem:[%s3 + $0x10] sm:$0xf]
        %v466 = vld [vmem:[%s3 + $0x14] sm:$0xf]
        %v467 = vld [vmem:[%s3 + $0x18] sm:$0xf]
        %v468 = vld [vmem:[%s3 + $0x1c] sm:$0xf]
        %v469 = vld [vmem:[#allocation2] sm:$0xff]
        %v470 = vld [vmem:[#allocation2 + $0x8] sm:$0xff]
        %v471 = vld [vmem:[#allocation2 + $0x10] sm:$0xff]
        %v472 = vld [vmem:[#allocation2 + $0x18] sm:$0xff]
        %v473 = vld [vmem:[%s4] sm:$0xff]
        %v474 = vld [vmem:[%s4 + $0x8] sm:$0xff]
        %v475 = vld [vmem:[%s4 + $0x10] sm:$0xff]
        %v476 = vld [vmem:[%s4 + $0x18] sm:$0xff]
        %v477 = vld [vmem:[%s4 + $0x20] sm:$0xff]
        %v478 = vld [vmem:[%s4 + $0x28] sm:$0xff]
        %v479 = vld [vmem:[%s4 + $0x30] sm:$0xff]
        %v480 = vld [vmem:[%s4 + $0x38] sm:$0xff]
        %482 = vset.pattern.permute.xlu0 0
        %483 = vperm.xlu0 %482, %v473
        %v484 = vpop.permute.xlu0 %483
        %487 = vset.pattern.permute.xlu0 0
        %488 = vperm.xlu0 %487, %v474
        %v489 = vpop.permute.xlu0 %488
        %492 = vset.pattern.permute.xlu0 0
        %493 = vperm.xlu0 %492, %v475
        %v494 = vpop.permute.xlu0 %493
        %497 = vset.pattern.permute.xlu0 0
        %498 = vperm.xlu0 %497, %v476
        %v499 = vpop.permute.xlu0 %498
        %502 = vset.pattern.permute.xlu0 0
        %503 = vperm.xlu0 %502, %v477
        %v504 = vpop.permute.xlu0 %503
        %507 = vset.pattern.permute.xlu0 0
        %508 = vperm.xlu0 %507, %v478
        %v509 = vpop.permute.xlu0 %508
        %512 = vset.pattern.permute.xlu0 0
        %513 = vperm.xlu0 %512, %v479
        %v514 = vpop.permute.xlu0 %513
        %517 = vset.pattern.permute.xlu0 0
        %518 = vperm.xlu0 %517, %v480
        %v519 = vpop.permute.xlu0 %518
        %v529 = vunpack.c.l.b16 %v461
        %v530 = vunpack.c.l.b16 %v462
        %v531 = vunpack.c.l.b16 %v463
        %v532 = vunpack.c.l.b16 %v464
        %v533 = vunpack.c.l.b16 %v465
        %v534 = vunpack.c.l.b16 %v466
        %v535 = vunpack.c.l.b16 %v467
        %v536 = vunpack.c.l.b16 %v468
        %v537 = vpack.c.b16 %v530, %v529
        %v538 = vpack.c.b16 %v532, %v531
        %v539 = vpack.c.b16 %v534, %v533
        %v540 = vpack.c.b16 %v536, %v535
        %v545 = vunpack.c.l.b16 %v469
        %v546 = vunpack.c.h.b16 %v469
        %v547 = vunpack.c.l.b16 %v470
        %v548 = vunpack.c.h.b16 %v470
        %v549 = vunpack.c.l.b16 %v471
        %v550 = vunpack.c.h.b16 %v471
        %v551 = vunpack.c.l.b16 %v472
        %v552 = vunpack.c.h.b16 %v472
        %v553 = vpack.c.b16 %v549, %v545
        %v554 = vpack.c.b16 %v550, %v546
        %v555 = vpack.c.b16 %v551, %v547
        %v556 = vpack.c.b16 %v552, %v548
        %vm561 = vcmask 130048
        %v563 = vsel %vm561, %v537, 0
        %v566 = vsel %vm561, %v538, 0
        %v569 = vsel %vm561, %v539, 0
        %v572 = vsel %vm561, %v540, 0
        %574 = vmatprep.subr.bf16.mxu0 0
        %575 = vmatpush1.bf16.msra.mxu0 0
        %576 = vmatprep.subr.bf16.mxu0 0
        %577 = vmatpush1.bf16.msra.mxu0 0
        %578 = vmatprep.subr.bf16.mxu0 0
        %579 = vmatpush1.bf16.msra.mxu0 0
        %580 = vmatprep.subr.bf16.mxu0 0
        %581 = vmatpush1.bf16.msra.mxu0 0
        %582 = vmatprep.subr.bf16.mxu0 0
        %583 = vmatpush1.bf16.msra.mxu0 0
        %584 = vmatprep.subr.bf16.mxu0 0
        %585 = vmatpush1.bf16.msra.mxu0 0
        %586 = vmatprep.subr.bf16.mxu0 0
        %587 = vmatpush1.bf16.msra.mxu0 0
        %588 = vmatprep.subr.bf16.mxu0 %v554
        %589 = vmatpush1.bf16.msra.mxu0 %v553
        %590 = vmatprep.subr.bf16.mxu0 0
        %591 = vmatpush2.bf16.msra.mxu0 0
        %592 = vmatprep.subr.bf16.mxu0 0
        %593 = vmatpush2.bf16.msra.mxu0 0
        %594 = vmatprep.subr.bf16.mxu0 0
        %595 = vmatpush2.bf16.msra.mxu0 0
        %596 = vmatprep.subr.bf16.mxu0 0
        %597 = vmatpush2.bf16.msra.mxu0 0
        %598 = vmatprep.subr.bf16.mxu0 0
        %599 = vmatpush2.bf16.msra.mxu0 0
        %600 = vmatprep.subr.bf16.mxu0 0
        %601 = vmatpush2.bf16.msra.mxu0 0
        %602 = vmatprep.subr.bf16.mxu0 0
        %603 = vmatpush2.bf16.msra.mxu0 0
        %604 = vmatprep.subr.bf16.mxu0 0
        %605 = vmatpush2.bf16.msra.mxu0 0
        %606 = vmatprep.mubr.bf16.mxu0 0
        %607 = vmatmul.mubr.bf16.gmra.mxu0 %v563
        %v608 = vpop.f32.mrf.mxu0
        %v609 = vadd.f32 %v484, %v608
        %v610 = vpop.f32.mrf.mxu0
        %v611 = vadd.f32 %v484, %v610
        %v612 = vpop.f32.mrf.mxu0
        %v613 = vadd.f32 %v489, %v612
        %v614 = vpop.f32.mrf.mxu0
        %v615 = vadd.f32 %v489, %v614
        %616 = vmatprep.mubr.bf16.mxu0 0
        %617 = vmatmul.mubr.bf16.gmra.mxu0 %v566
        %v618 = vpop.f32.mrf.mxu0
        %v619 = vadd.f32 %v494, %v618
        %v620 = vpop.f32.mrf.mxu0
        %v621 = vadd.f32 %v494, %v620
        %v622 = vpop.f32.mrf.mxu0
        %v623 = vadd.f32 %v499, %v622
        %v624 = vpop.f32.mrf.mxu0
        %v625 = vadd.f32 %v499, %v624
        %626 = vmatprep.mubr.bf16.mxu0 0
        %627 = vmatmul.mubr.bf16.gmra.mxu0 %v569
        %v628 = vpop.f32.mrf.mxu0
        %v629 = vadd.f32 %v504, %v628
        %v630 = vpop.f32.mrf.mxu0
        %v631 = vadd.f32 %v504, %v630
        %v632 = vpop.f32.mrf.mxu0
        %v633 = vadd.f32 %v509, %v632
        %v634 = vpop.f32.mrf.mxu0
        %v635 = vadd.f32 %v509, %v634
        %636 = vmatprep.mubr.bf16.mxu0 0
        %637 = vmatmul.mubr.bf16.gmra.mxu0 %v572
        %v638 = vpop.f32.mrf.mxu0
        %v639 = vadd.f32 %v514, %v638
        %v640 = vpop.f32.mrf.mxu0
        %v641 = vadd.f32 %v514, %v640
        %v642 = vpop.f32.mrf.mxu0
        %v643 = vadd.f32 %v519, %v642
        %v644 = vpop.f32.mrf.mxu0
        %v645 = vadd.f32 %v519, %v644
        %646 = vdwg.mxu0
        %647 = vmatprep.subr.bf16.mxu0 0
        %648 = vmatpush1.bf16.msra.mxu0 0
        %649 = vmatprep.subr.bf16.mxu0 0
        %650 = vmatpush1.bf16.msra.mxu0 0
        %651 = vmatprep.subr.bf16.mxu0 0
        %652 = vmatpush1.bf16.msra.mxu0 0
        %653 = vmatprep.subr.bf16.mxu0 0
        %654 = vmatpush1.bf16.msra.mxu0 0
        %655 = vmatprep.subr.bf16.mxu0 0
        %656 = vmatpush1.bf16.msra.mxu0 0
        %657 = vmatprep.subr.bf16.mxu0 0
        %658 = vmatpush1.bf16.msra.mxu0 0
        %659 = vmatprep.subr.bf16.mxu0 0
        %660 = vmatpush1.bf16.msra.mxu0 0
        %661 = vmatprep.subr.bf16.mxu0 %v556
        %662 = vmatpush1.bf16.msra.mxu0 %v555
        %663 = vmatprep.subr.bf16.mxu0 0
        %664 = vmatpush2.bf16.msra.mxu0 0
        %665 = vmatprep.subr.bf16.mxu0 0
        %666 = vmatpush2.bf16.msra.mxu0 0
        %667 = vmatprep.subr.bf16.mxu0 0
        %668 = vmatpush2.bf16.msra.mxu0 0
        %669 = vmatprep.subr.bf16.mxu0 0
        %670 = vmatpush2.bf16.msra.mxu0 0
        %671 = vmatprep.subr.bf16.mxu0 0
        %672 = vmatpush2.bf16.msra.mxu0 0
        %673 = vmatprep.subr.bf16.mxu0 0
        %674 = vmatpush2.bf16.msra.mxu0 0
        %675 = vmatprep.subr.bf16.mxu0 0
        %676 = vmatpush2.bf16.msra.mxu0 0
        %677 = vmatprep.subr.bf16.mxu0 0
        %678 = vmatpush2.bf16.msra.mxu0 0
        %679 = vmatprep.mubr.bf16.mxu0 0
        %680 = vmatmul.mubr.bf16.gmra.mxu0 %v563
        %v681 = vpop.f32.mrf.mxu0
        %v682 = vadd.f32 %v484, %v681
        %v683 = vpop.f32.mrf.mxu0
        %v684 = vadd.f32 %v484, %v683
        %v685 = vpop.f32.mrf.mxu0
        %v686 = vadd.f32 %v489, %v685
        %v687 = vpop.f32.mrf.mxu0
        %v688 = vadd.f32 %v489, %v687
        %689 = vmatprep.mubr.bf16.mxu0 0
        %690 = vmatmul.mubr.bf16.gmra.mxu0 %v566
        %v691 = vpop.f32.mrf.mxu0
        %v692 = vadd.f32 %v494, %v691
        %v693 = vpop.f32.mrf.mxu0
        %v694 = vadd.f32 %v494, %v693
        %v695 = vpop.f32.mrf.mxu0
        %v696 = vadd.f32 %v499, %v695
        %v697 = vpop.f32.mrf.mxu0
        %v698 = vadd.f32 %v499, %v697
        %699 = vmatprep.mubr.bf16.mxu0 0
        %700 = vmatmul.mubr.bf16.gmra.mxu0 %v569
        %v701 = vpop.f32.mrf.mxu0
        %v702 = vadd.f32 %v504, %v701
        %v703 = vpop.f32.mrf.mxu0
        %v704 = vadd.f32 %v504, %v703
        %v705 = vpop.f32.mrf.mxu0
        %v706 = vadd.f32 %v509, %v705
        %v707 = vpop.f32.mrf.mxu0
        %v708 = vadd.f32 %v509, %v707
        %709 = vmatprep.mubr.bf16.mxu0 0
        %710 = vmatmul.mubr.bf16.gmra.mxu0 %v572
        %v711 = vpop.f32.mrf.mxu0
        %v712 = vadd.f32 %v514, %v711
        %v713 = vpop.f32.mrf.mxu0
        %v714 = vadd.f32 %v514, %v713
        %v715 = vpop.f32.mrf.mxu0
        %v716 = vadd.f32 %v519, %v715
        %v717 = vpop.f32.mrf.mxu0
        %v718 = vadd.f32 %v519, %v717
        %719 = vdwg.mxu0
        %v720 = vmax.f32 %v609, 0.0
        %v721 = vmax.f32 %v611, 0.0
        %v722 = vmax.f32 %v682, 0.0
        %v723 = vmax.f32 %v684, 0.0
        %v724 = vmax.f32 %v613, 0.0
        %v725 = vmax.f32 %v615, 0.0
        %v726 = vmax.f32 %v686, 0.0
        %v727 = vmax.f32 %v688, 0.0
        %v728 = vmax.f32 %v619, 0.0
        %v729 = vmax.f32 %v621, 0.0
        %v730 = vmax.f32 %v692, 0.0
        %v731 = vmax.f32 %v694, 0.0
        %v732 = vmax.f32 %v623, 0.0
        %v733 = vmax.f32 %v625, 0.0
        %v734 = vmax.f32 %v696, 0.0
        %v735 = vmax.f32 %v698, 0.0
        %v736 = vmax.f32 %v629, 0.0
        %v737 = vmax.f32 %v631, 0.0
        %v738 = vmax.f32 %v702, 0.0
        %v739 = vmax.f32 %v704, 0.0
        %v740 = vmax.f32 %v633, 0.0
        %v741 = vmax.f32 %v635, 0.0
        %v742 = vmax.f32 %v706, 0.0
        %v743 = vmax.f32 %v708, 0.0
        %v744 = vmax.f32 %v639, 0.0
        %v745 = vmax.f32 %v641, 0.0
        %v746 = vmax.f32 %v712, 0.0
        %v747 = vmax.f32 %v714, 0.0
        %v748 = vmax.f32 %v643, 0.0
        %v749 = vmax.f32 %v645, 0.0
        %v750 = vmax.f32 %v716, 0.0
        %v751 = vmax.f32 %v718, 0.0
        %v752 = vld [vmem:[%s5] sm:$0xf]
        %v753 = vld [vmem:[%s5 + $0x4] sm:$0xf]
        %v754 = vpack.c.bf16 %v724, %v720
        %v755 = vpack.c.bf16 %v725, %v721
        %v756 = vpack.c.bf16 %v726, %v722
        %v757 = vpack.c.bf16 %v727, %v723
        %v758 = vpack.c.bf16 %v732, %v728
        %v759 = vpack.c.bf16 %v733, %v729
        %v760 = vpack.c.bf16 %v734, %v730
        %v761 = vpack.c.bf16 %v735, %v731
        %v762 = vpack.c.bf16 %v740, %v736
        %v763 = vpack.c.bf16 %v741, %v737
        %v764 = vpack.c.bf16 %v742, %v738
        %v765 = vpack.c.bf16 %v743, %v739
        %v766 = vpack.c.bf16 %v748, %v744
        %v767 = vpack.c.bf16 %v749, %v745
        %v768 = vpack.c.bf16 %v750, %v746
        %v769 = vpack.c.bf16 %v751, %v747
        %v770 = vld [vmem:[%s6] sm:$0xff]
        %v771 = vld [vmem:[%s6 + $0x8] sm:$0xff]
        %773 = vset.pattern.permute.xlu0 0
        %774 = vperm.xlu0 %773, %v770
        %v775 = vpop.permute.xlu0 %774
        %778 = vset.pattern.permute.xlu0 0
        %779 = vperm.xlu0 %778, %v771
        %v780 = vpop.permute.xlu0 %779
        %v784 = vunpack.c.l.b16 %v752
        %v785 = vunpack.c.l.b16 %v753
        %v786 = vpack.c.b16 %v785, %v784
        %vm787 = vcmask 523264
        %v789 = vsel %vm787, %v786, 0
        %791 = vmatprep.subr.bf16.mxu0 0
        %792 = vmatpush1.bf16.msra.mxu0 0
        %793 = vmatprep.subr.bf16.mxu0 0
        %794 = vmatpush1.bf16.msra.mxu0 0
        %795 = vmatprep.subr.bf16.mxu0 0
        %796 = vmatpush1.bf16.msra.mxu0 0
        %797 = vmatprep.subr.bf16.mxu0 0
        %798 = vmatpush1.bf16.msra.mxu0 0
        %799 = vmatprep.subr.bf16.mxu0 %v767
        %800 = vmatpush1.bf16.msra.mxu0 %v766
        %801 = vmatprep.subr.bf16.mxu0 %v763
        %802 = vmatpush1.bf16.msra.mxu0 %v762
        %803 = vmatprep.subr.bf16.mxu0 %v759
        %804 = vmatpush1.bf16.msra.mxu0 %v758
        %805 = vmatprep.subr.bf16.mxu0 %v755
        %806 = vmatpush1.bf16.msra.mxu0 %v754
        %807 = vmatprep.subr.bf16.mxu0 0
        %808 = vmatpush2.bf16.msra.mxu0 0
        %809 = vmatprep.subr.bf16.mxu0 0
        %810 = vmatpush2.bf16.msra.mxu0 0
        %811 = vmatprep.subr.bf16.mxu0 0
        %812 = vmatpush2.bf16.msra.mxu0 0
        %813 = vmatprep.subr.bf16.mxu0 0
        %814 = vmatpush2.bf16.msra.mxu0 0
        %815 = vmatprep.subr.bf16.mxu0 0
        %816 = vmatpush2.bf16.msra.mxu0 0
        %817 = vmatprep.subr.bf16.mxu0 0
        %818 = vmatpush2.bf16.msra.mxu0 0
        %819 = vmatprep.subr.bf16.mxu0 0
        %820 = vmatpush2.bf16.msra.mxu0 0
        %821 = vmatprep.subr.bf16.mxu0 0
        %822 = vmatpush2.bf16.msra.mxu0 0
        %823 = vmatprep.mubr.bf16.mxu0 0
        %824 = vmatmul.mubr.bf16.gmra.mxu0 %v789
        %v825 = vpop.f32.mrf.mxu0
        %v826 = vadd.f32 %v775, %v825
        %v827 = vpop.f32.mrf.mxu0
        %v828 = vadd.f32 %v775, %v827
        %v829 = vpop.f32.mrf.mxu0
        %v830 = vadd.f32 %v780, %v829
        %v831 = vpop.f32.mrf.mxu0
        %v832 = vadd.f32 %v780, %v831
        %833 = vdwg.mxu0
        %834 = vmatprep.subr.bf16.mxu0 0
        %835 = vmatpush1.bf16.msra.mxu0 0
        %836 = vmatprep.subr.bf16.mxu0 0
        %837 = vmatpush1.bf16.msra.mxu0 0
        %838 = vmatprep.subr.bf16.mxu0 0
        %839 = vmatpush1.bf16.msra.mxu0 0
        %840 = vmatprep.subr.bf16.mxu0 0
        %841 = vmatpush1.bf16.msra.mxu0 0
        %842 = vmatprep.subr.bf16.mxu0 %v769
        %843 = vmatpush1.bf16.msra.mxu0 %v768
        %844 = vmatprep.subr.bf16.mxu0 %v765
        %845 = vmatpush1.bf16.msra.mxu0 %v764
        %846 = vmatprep.subr.bf16.mxu0 %v761
        %847 = vmatpush1.bf16.msra.mxu0 %v760
        %848 = vmatprep.subr.bf16.mxu0 %v757
        %849 = vmatpush1.bf16.msra.mxu0 %v756
        %850 = vmatprep.subr.bf16.mxu0 0
        %851 = vmatpush2.bf16.msra.mxu0 0
        %852 = vmatprep.subr.bf16.mxu0 0
        %853 = vmatpush2.bf16.msra.mxu0 0
        %854 = vmatprep.subr.bf16.mxu0 0
        %855 = vmatpush2.bf16.msra.mxu0 0
        %856 = vmatprep.subr.bf16.mxu0 0
        %857 = vmatpush2.bf16.msra.mxu0 0
        %858 = vmatprep.subr.bf16.mxu0 0
        %859 = vmatpush2.bf16.msra.mxu0 0
        %860 = vmatprep.subr.bf16.mxu0 0
        %861 = vmatpush2.bf16.msra.mxu0 0
        %862 = vmatprep.subr.bf16.mxu0 0
        %863 = vmatpush2.bf16.msra.mxu0 0
        %864 = vmatprep.subr.bf16.mxu0 0
        %865 = vmatpush2.bf16.msra.mxu0 0
        %866 = vmatprep.mubr.bf16.mxu0 0
        %867 = vmatmul.mubr.bf16.gmra.mxu0 %v789
        %v868 = vpop.f32.mrf.mxu0
        %v869 = vadd.f32 %v775, %v868
        %v870 = vpop.f32.mrf.mxu0
        %v871 = vadd.f32 %v775, %v870
        %v872 = vpop.f32.mrf.mxu0
        %v873 = vadd.f32 %v780, %v872
        %v874 = vpop.f32.mrf.mxu0
        %v875 = vadd.f32 %v780, %v874
        %876 = vdwg.mxu0
        %v877 = vld [vmem:[%s280] sm:$0xf]
        %v878 = vld [vmem:[%s280 + $0x4] sm:$0xf]
        %v879 = vunpack.c.l.bf16 %v877
        %v880 = vunpack.c.l.bf16 %v878
        %v881 = vadd.f32 %v879, %v826
        %v882 = vadd.f32 %v880, %v830
        %v883 = vpack.c.bf16 %v882, %v881
        %v885 = vunpack.c.l.b16 %v883
        %v886 = vunpack.c.h.b16 %v883
        %v887 = vpack.c.b16 %v885, %v885
        %v888 = vpack.c.b16 %v886, %v886
        %891 = vst [vmem:[%s274] sm:$0xf] %v887
        %892 = vst [vmem:[%s274 + $0x4] sm:$0xf] %v888
        %v893 = vld [vmem:[%s338] sm:$0xf]
        %v894 = vld [vmem:[%s338 + $0x4] sm:$0xf]
        %v895 = vunpack.c.l.bf16 %v893
        %v896 = vunpack.c.l.bf16 %v894
        %v897 = vadd.f32 %v895, %v828
        %v898 = vadd.f32 %v896, %v832
        %v899 = vpack.c.bf16 %v898, %v897
        %v901 = vunpack.c.l.b16 %v899
        %v902 = vunpack.c.h.b16 %v899
        %v903 = vpack.c.b16 %v901, %v901
        %v904 = vpack.c.b16 %v902, %v902
        %s907 = scalar_lea.vmem %s274, 8 [#allocation3]
        %908 = vst [vmem:[%s907] sm:$0xf] %v903
        %909 = vst [vmem:[%s907 + $0x4] sm:$0xf] %v904
        %v910 = vld [vmem:[%s379] sm:$0xf]
        %v911 = vld [vmem:[%s379 + $0x4] sm:$0xf]
        %v912 = vunpack.c.l.bf16 %v910
        %v913 = vunpack.c.l.bf16 %v911
        %v914 = vadd.f32 %v912, %v869
        %v915 = vadd.f32 %v913, %v873
        %v916 = vpack.c.bf16 %v915, %v914
        %v918 = vunpack.c.l.b16 %v916
        %v919 = vunpack.c.h.b16 %v916
        %v920 = vpack.c.b16 %v918, %v918
        %v921 = vpack.c.b16 %v919, %v919
        %s924 = scalar_lea.vmem %s274, 16 [#allocation3]
        %925 = vst [vmem:[%s924] sm:$0xf] %v920
        %926 = vst [vmem:[%s924 + $0x4] sm:$0xf] %v921
        %v927 = vld [vmem:[%s420] sm:$0xf]
        %v928 = vld [vmem:[%s420 + $0x4] sm:$0xf]
        %v929 = vunpack.c.l.bf16 %v927
        %v930 = vunpack.c.l.bf16 %v928
        %v931 = vadd.f32 %v929, %v871
        %v932 = vadd.f32 %v930, %v875
        %v933 = vpack.c.bf16 %v932, %v931
        %v935 = vunpack.c.l.b16 %v933
        %v936 = vunpack.c.h.b16 %v933
        %v937 = vpack.c.b16 %v935, %v935
        %v938 = vpack.c.b16 %v936, %v936
        %s941 = scalar_lea.vmem %s274, 24 [#allocation3]
        %942 = vst [vmem:[%s941] sm:$0xf] %v937
        %943 = vst [vmem:[%s941 + $0x4] sm:$0xf] %v938
        %s944 = sand.u32 %s181, 1
        %s945 = scalar_lea.sflag [#allocation4], %s944
        %s946 = sand.u32 %s181, 1
        %s947 = smul.addr %s946, 32
        %s948 = scalar_lea.vmem [#allocation3], %s947
        // Predicated region
        $region49: #{tpu_custom_call.1} parent=47 // pred_check
          %p949 = pneg %p191
        $region50: #{tpu_custom_call.1} parent=47 // pred_check_branch
          %951 = sbr.rel (%p949) target = $region52
        $region51: #{tpu_custom_call.1} parent=47 // pred_region
          %s952 = smul.u32 4, %s21
          %s954 = ssub.s32 512, 512
          %955 = vsyncadd %s945, %s954
          %s956 = smul.addr %s952, 2
          %s957 = smul.addr %s956, 64
          %s958 = scalar_lea.hbm %s7, %s957
          %s959 = sshll.u32 %s948, 4
          %s960 = int_to_ptr.vmem [resolvable:$true] %s959
          %965 = dma.vmem_to_hbm [thread:$0]  %s960, 512, %s958, %s945, 64, 64, 4
        $region52: #{tpu_custom_call.1} parent=47 // pred_fallthru
          _
      $region48: #{tpu_custom_call.1} parent=5 // pred_fallthru
        _
      %p966 = scmp.le.s32.totalorder 2, %s16
      // Predicated region
      $region53: #{tpu_custom_call.1} parent=5 // pred_check
        %p967 = pneg %p966
      $region54: #{tpu_custom_call.1} parent=5 // pred_check_branch
        %969 = sbr.rel (%p967) target = $region56
      $region55: #{tpu_custom_call.1} parent=5 // pred_region
        %s970 = ssub.s32 %s16, 2
        // Predicated region
        $region57: #{tpu_custom_call.1} parent=55 // pred_check
          %p971 = pneg %p197
        $region58: #{tpu_custom_call.1} parent=55 // pred_check_branch
          %973 = sbr.rel (%p971) target = $region60
        $region59: #{tpu_custom_call.1} parent=55 // pred_region
          %s974 = sand.u32 %s182, 1
          %s975 = scalar_lea.sflag [#allocation4], %s974
          %s976 = sand.u32 %s182, 1
          %s977 = smul.addr %s976, 32
          %s978 = scalar_lea.vmem [#allocation3], %s977
          %979 = dma.done %s975, 512
        $region60: #{tpu_custom_call.1} parent=55 // pred_fallthru
          _
      $region56: #{tpu_custom_call.1} parent=5 // pred_fallthru
        _
    $region6: #{tpu_custom_call.1} parent=1 // loop_footer
      %s20 = sadd.s32 1, %s16
    $region7: #{tpu_custom_call.1} parent=1 // loop_footer_branch
      %15 = sbr.rel target = $region3
    $region8: #{tpu_custom_call.1} parent=1 // loop_exit
      _
    %980 = vsyncpa [#allocation4], 1
    %s981 = scalar_lea.sflag [#allocation4], 1
    %982 = vsyncpa %s981, 1

</llo_original>
